<compile_context>
chip_gen: v6e
topology: v6e:2x2x1
jax: 0.10.0
libtpu: 0.0.40
codegen_flags: <defaults>
</compile_context>

<pallas_src>
import functools

import jax
import jax.numpy as jnp
from jax import lax
from jax.experimental import pallas as pl
from jax.experimental.pallas import tpu as pltpu

_VMEM_LIMIT_BYTES = 48 * 1024 * 1024  # safe on v5e/v6e (128 MiB phys) and v7x (64 MiB phys)


def _round_up(x, m):
    return ((x + m - 1) // m) * m


def _buffered_spec(block_shape, index_map, depth):
    """BlockSpec with requested pipeline depth; graceful fallback if pipeline_mode /
    pl.Buffered is unavailable in the installed jax version."""
    try:
        return pl.BlockSpec(block_shape, index_map, pipeline_mode=pl.Buffered(depth))
    except Exception:  # pragma: no cover - defensive fallback only
        return pl.BlockSpec(block_shape, index_map)


def _overlap_add(w_all, x, *, K, C_outp, W_slab):
    """All-tap conv-transpose contribution of one input slab.

    w_all : (K*C_outp, C_in) f32, row k*C_outp + co holds weight[:, co, k]
    x     : (C_in, W_in)     f32, columns outside the valid range must already be zero
    Returns acc : (C_outp, W_slab) f32 with acc[:, j] = sum_k sum_ci w[ci,co,k] * x[ci, j-k].
    Requires W_slab - W_in >= K - 1 so the lane-roll wrap-around columns are zero.
    """
    C_in, W_in = x.shape
    pad = W_slab - W_in
    if pad > 0:
        x = jnp.concatenate([x, jnp.zeros((C_in, pad), x.dtype)], axis=1)
    # One fused MXU call covering all K taps.
    p = jnp.dot(w_all, x, preferred_element_type=jnp.float32)          # (K*C_outp, W_slab)
    acc = p[0:C_outp, :]
    for k in range(1, K):                                              # static unroll over taps
        acc = acc + pltpu.roll(p[k * C_outp:(k + 1) * C_outp, :], shift=k, axis=1)
    return acc


def _convt_single_kernel(x_ref, w_ref, b_ref, o_ref, *, K, C_outp, W_slab):
    # x_ref: (Bt, C_in, L_in) exact (no OOB); o_ref: (Bt, C_outp, W_slab) lane-dense.
    w = w_ref[...]
    b = b_ref[...]
    for i in range(x_ref.shape[0]):                                    # static batch fold
        acc = _overlap_add(w, x_ref[i], K=K, C_outp=C_outp, W_slab=W_slab)
        o_ref[i] = (acc + b).astype(o_ref.dtype)                       # single unmasked store


def _convt_tiled_kernel(x_ref, xh_ref, w_ref, b_ref, o_ref, *, K, C_outp, TILE, L_in):
    # x_ref : (1, C_in, TILE)  current input tile (tail may be out-of-bounds garbage)
    # xh_ref: (1, C_in, 128)   the 128 input columns immediately preceding this tile
    # o_ref : (1, C_outp, TILE) lane-dense output tile
    t = pl.program_id(1)
    w = w_ref[...]

    # ---- in-tile contribution ------------------------------------------------------
    x = x_ref[0]
    col = t * TILE + lax.broadcasted_iota(jnp.int32, x.shape, 1)
    x = jnp.where(col < L_in, x, jnp.zeros_like(x))                    # mask OOB tail
    acc = _overlap_add(w, x, K=K, C_outp=C_outp, W_slab=TILE + 128)

    # ---- halo contribution (taps reaching in from the previous <=128 columns) -------
    xh = xh_ref[0]
    hcol = t * TILE - 128 + lax.broadcasted_iota(jnp.int32, xh.shape, 1)
    xh = jnp.where((hcol >= 0) & (hcol < L_in), xh, jnp.zeros_like(xh))
    acc_h = _overlap_add(w, xh, K=K, C_outp=C_outp, W_slab=256)
    spill = acc_h[:, 128:]                                             # lands in out cols [0,128)
    halo = jnp.concatenate([spill, jnp.zeros((C_outp, TILE - 128), jnp.float32)], axis=1)

    o_ref[0] = (acc[:, :TILE] + halo + b_ref[...]).astype(o_ref.dtype)  # single store


def norm_conv_transpose1d(x, weight, bias, *, tile_l=1024, max_single_lanes=2048):
    """Forward of NormConvTranspose1d with norm='none' (ConvTranspose1d + Identity).

    x      : (B, C_in, L_in)  float32, PyTorch NCL layout (kept as-is, no transposes)
    weight : (C_in, C_out, K) float32, PyTorch ConvTranspose1d weight layout
    bias   : (C_out,)         float32
    returns (B, C_out, L_out) with L_out = L_in + K - 1.
    """
    # TODO(synk): only the default stride=1 / padding=0 / dilation=1 / output_padding=0
    # ConvTranspose1d configuration is implemented (stride>1 needs strided placement).
    B, C_in, L_in = x.shape
    c_in_w, C_out, K = weight.shape
    assert c_in_w == C_in
    L_out = L_in + K - 1

    # Pad C_out to a multiple of 8 so per-tap sublane slices of the fused matmul result
    # stay aligned; padded rows are zero and are sliced away at the end.
    C_outp = _round_up(C_out, 8)
    w_all = jnp.transpose(weight, (2, 1, 0))                            # (K, C_out, C_in), tiny
    b_col = bias
    if C_outp != C_out:
        w_all = jnp.pad(w_all, ((0, 0), (0, C_outp - C_out), (0, 0)))
        b_col = jnp.pad(bias, (0, C_outp - C_out))
    w_all = w_all.reshape(K * C_outp, C_in)
    b_col = b_col.reshape(C_outp, 1)
    # TODO(synk): optionally cast x / w_all to bf16 here (kernel is HBM-bound -> ~2x) if
    # the caller accepts the small deviation from PyTorch f32 numerics.

    L_out_p = _round_up(L_out, 128)                                     # lane-dense output length

    if L_out_p <= max_single_lanes:
        # ---------- short sequences: one L tile, fold small batches into one step ----------
        W_slab = L_out_p
        assert W_slab - L_in >= K - 1, "roll wrap-around columns must be zero padding"
        Bt = B if B <= 4 else 1
        if B % Bt:
            Bt = 1
        kernel = functools.partial(_convt_single_kernel, K=K, C_outp=C_outp, W_slab=W_slab)
        out_p = pl.pallas_call(
            kernel,
            out_shape=jax.ShapeDtypeStruct((B, C_outp, W_slab), x.dtype),
            grid_spec=pltpu.PrefetchScalarGridSpec(
                num_scalar_prefetch=0,
                grid=(B // Bt,),
                in_specs=[
                    pl.BlockSpec((Bt, C_in, L_in), lambda bb: (bb, 0, 0)),    # unpadded x
                    pl.BlockSpec((K * C_outp, C_in), lambda bb: (0, 0)),      # fused weights
                    pl.BlockSpec((C_outp, 1), lambda bb: (0, 0)),             # bias
                ],
                out_specs=pl.BlockSpec((Bt, C_outp, W_slab), lambda bb: (bb, 0, 0)),
            ),
            compiler_params=pltpu.CompilerParams(
                dimension_semantics=("parallel",),
                vmem_limit_bytes=_VMEM_LIMIT_BYTES,
            ),
        )(x, w_all, b_col)
    else:
        # ---------- long sequences: (B, L-tile) grid with a 128-lane input halo ------------
        TILE = tile_l
        assert TILE % 128 == 0 and TILE >= 256
        assert K - 1 <= 128, "halo covers at most 128 lanes"
        NLT = pl.cdiv(L_out, TILE)              # output tiles
        NBX = pl.cdiv(L_in, TILE)               # valid TILE-wide input blocks
        NBH = pl.cdiv(L_in, 128)                # valid 128-wide input blocks
        R = TILE // 128

        def x_main_map(bb, t):                  # clamp block idx; kernel masks with true t
            return (bb, 0, jnp.minimum(t, NBX - 1))

        def x_halo_map(bb, t):                  # the 128 input columns preceding tile t
            return (bb, 0, jnp.clip(t * R - 1, 0, NBH - 1))

        kernel = functools.partial(_convt_tiled_kernel, K=K, C_outp=C_outp,
                                   TILE=TILE, L_in=L_in)
        out_p = pl.pallas_call(
            kernel,
            out_shape=jax.ShapeDtypeStruct((B, C_outp, NLT * TILE), x.dtype),
            grid_spec=pltpu.PrefetchScalarGridSpec(
                num_scalar_prefetch=0,
                grid=(B, NLT),
                in_specs=[
                    _buffered_spec((1, C_in, TILE), x_main_map, 3),           # x tile (3-deep)
                    pl.BlockSpec((1, C_in, 128), x_halo_map),                 # x halo
                    pl.BlockSpec((K * C_outp, C_in), lambda bb, t: (0, 0)),   # fused weights
                    pl.BlockSpec((C_outp, 1), lambda bb, t: (0, 0)),          # bias
                ],
                out_specs=pl.BlockSpec((1, C_outp, TILE), lambda bb, t: (bb, 0, t)),
            ),
            compiler_params=pltpu.CompilerParams(
                dimension_semantics=("parallel", "parallel"),
                vmem_limit_bytes=_VMEM_LIMIT_BYTES,
            ),
        )(x, x, w_all, b_col)

    # Exact-shape view (single lane-aligned slice). Downstream kernels that can consume
    # the padded (C_outp, 128-multiple) slab directly should skip this.
    return out_p[:, :C_out, :L_out]


def _reference(x, weight, bias):
    """Plain-JAX ConvTranspose1d reference (stride=1, padding=0)."""
    B, C_in, L_in = x.shape
    _, C_out, K = weight.shape
    L_out = L_in + K - 1
    y = jnp.zeros((B, C_out, L_out), jnp.float32)
    for k in range(K):
        contrib = jnp.einsum("bci,co->boi", x, weight[:, :, k])
        y = y.at[:, :, k:k + L_in].add(contrib)
    return y + bias[None, :, None]


if __name__ == "__main__":
    key = jax.random.PRNGKey(0)
    k1, k2, k3, k4, k5, k6 = jax.random.split(key, 6)

    # --- small shapes (single-tile fast path, batch folded into one grid step) ---
    B, C_in, C_out, L_in, K = 2, 4, 8, 16, 4
    bound = 1.0 / (C_in * K) ** 0.5
    x = jax.random.normal(k1, (B, C_in, L_in), jnp.float32)
    w = jax.random.uniform(k2, (C_in, C_out, K), jnp.float32, -bound, bound)
    b = jax.random.uniform(k3, (C_out,), jnp.float32, -bound, bound)
    out = jax.block_until_ready(norm_conv_transpose1d(x, w, b))
    assert out.shape == (B, C_out, L_in + K - 1), out.shape
    assert jnp.allclose(out, _reference(x, w, b), atol=1e-4, rtol=1e-4), "small-shape mismatch"

    # --- longer sequence exercising the L-tiled halo path and C_out padding ---
    B2, C_in2, C_out2, L_in2, K2 = 2, 4, 6, 2500, 7
    bound2 = 1.0 / (C_in2 * K2) ** 0.5
    x2 = jax.random.normal(k4, (B2, C_in2, L_in2), jnp.float32)
    w2 = jax.random.uniform(k5, (C_in2, C_out2, K2), jnp.float32, -bound2, bound2)
    b2 = jax.random.uniform(k6, (C_out2,), jnp.float32, -bound2, bound2)
    out2 = jax.block_until_ready(norm_conv_transpose1d(x2, w2, b2))
    assert out2.shape == (B2, C_out2, L_in2 + K2 - 1), out2.shape
    assert jnp.allclose(out2, _reference(x2, w2, b2), atol=1e-4, rtol=1e-4), "tiled-path mismatch"

    print("KERNEL_OK")
</pallas_src>

<mosaic_0001>
module attributes {stable_mosaic.version = 11 : i64} {
  func.func @_convt_single_kernel(%arg0: i32, %arg1: memref<2x4x16xf32, #tpu.memory_space<vmem>>, %arg2: memref<32x4xf32, #tpu.memory_space<vmem>>, %arg3: memref<8x1xf32, #tpu.memory_space<vmem>>, %arg4: memref<2x8x128xf32, #tpu.memory_space<vmem>>) attributes {dimension_semantics = [#tpu.dimension_semantics<parallel>], iteration_bounds = array<i64: 1>, scalar_prefetch = 0 : i64, scratch_operands = 0 : i64, tpu.core_type = #tpu.core_type<tc>, window_params = [{transform_indices = @transform_0, window_bounds = array<i64: 2, 4, 16>}, {pipeline_mode = #tpu.pipeline_mode<synchronous>, transform_indices = @transform_1, window_bounds = array<i64: 32, 4>}, {pipeline_mode = #tpu.pipeline_mode<synchronous>, transform_indices = @transform_2, window_bounds = array<i64: 8, 1>}, {transform_indices = @transform_3, window_bounds = array<i64: 2, 8, 128>}]} {
    %c0 = arith.constant 0 : index
    %c0_0 = arith.constant 0 : index
    %0 = vector.load %arg2[%c0, %c0_0] : memref<32x4xf32, #tpu.memory_space<vmem>>, vector<32x4xf32>
    %c0_1 = arith.constant 0 : index
    %c0_2 = arith.constant 0 : index
    %1 = vector.load %arg3[%c0_1, %c0_2] : memref<8x1xf32, #tpu.memory_space<vmem>>, vector<8x1xf32>
    %c0_3 = arith.constant 0 : index
    %c0_4 = arith.constant 0 : index
    %c0_5 = arith.constant 0 : index
    %2 = vector.load %arg1[%c0_3, %c0_4, %c0_5] : memref<2x4x16xf32, #tpu.memory_space<vmem>>, vector<1x4x16xf32>
    %3 = vector.shape_cast %2 : vector<1x4x16xf32> to vector<4x16xf32>
    %cst = arith.constant 0.000000e+00 : f32
    %4 = vector.broadcast %cst : f32 to vector<4x112xf32>
    %5 = tpu.concatenate %3, %4 in 1 : vector<4x16xf32>, vector<4x112xf32> -> vector<4x128xf32>
    %cst_6 = arith.constant dense<0.000000e+00> : vector<32x128xf32>
    %6 = tpu.matmul %0, %5, %cst_6 {dimension_numbers = #tpu.dot_dimension_numbers<[1], [0], [0], [1], [0, 0, 1, 1], [], []>} : vector<32x4xf32>, vector<4x128xf32>, vector<32x128xf32> -> vector<32x128xf32>
    %7 = vector.extract_strided_slice %6 {offsets = [0, 0], sizes = [8, 128], strides = [1, 1]} : vector<32x128xf32> to vector<8x128xf32>
    %8 = vector.extract_strided_slice %6 {offsets = [8, 0], sizes = [8, 128], strides = [1, 1]} : vector<32x128xf32> to vector<8x128xf32>
    %c1_i32 = arith.constant 1 : i32
    %9 = tpu.dynamic_rotate %8 by %c1_i32 dim 1 : vector<8x128xf32>, i32 -> vector<8x128xf32>
    %10 = arith.addf %7, %9 : vector<8x128xf32>
    %11 = vector.extract_strided_slice %6 {offsets = [16, 0], sizes = [8, 128], strides = [1, 1]} : vector<32x128xf32> to vector<8x128xf32>
    %c2_i32 = arith.constant 2 : i32
    %12 = tpu.dynamic_rotate %11 by %c2_i32 dim 1 : vector<8x128xf32>, i32 -> vector<8x128xf32>
    %13 = arith.addf %10, %12 : vector<8x128xf32>
    %14 = vector.extract_strided_slice %6 {offsets = [24, 0], sizes = [8, 128], strides = [1, 1]} : vector<32x128xf32> to vector<8x128xf32>
    %c3_i32 = arith.constant 3 : i32
    %15 = tpu.dynamic_rotate %14 by %c3_i32 dim 1 : vector<8x128xf32>, i32 -> vector<8x128xf32>
    %16 = arith.addf %13, %15 : vector<8x128xf32>
    %17 = vector.broadcast %1 : vector<8x1xf32> to vector<8x128xf32>
    %18 = arith.addf %16, %17 : vector<8x128xf32>
    %c0_7 = arith.constant 0 : index
    %c0_8 = arith.constant 0 : index
    %c0_9 = arith.constant 0 : index
    %19 = vector.load %arg4[%c0_7, %c0_8, %c0_9] : memref<2x8x128xf32, #tpu.memory_space<vmem>>, vector<1x8x128xf32>
    %20 = vector.shape_cast %19 : vector<1x8x128xf32> to vector<8x128xf32>
    %21 = vector.shape_cast %18 : vector<8x128xf32> to vector<1x8x128xf32>
    tpu.vector_store %arg4[%c0_7, %c0_8, %c0_9], %21 {strides = array<i32>} : memref<2x8x128xf32, #tpu.memory_space<vmem>>, vector<1x8x128xf32>,
    %c1 = arith.constant 1 : index
    %c0_10 = arith.constant 0 : index
    %c0_11 = arith.constant 0 : index
    %22 = vector.load %arg1[%c1, %c0_10, %c0_11] : memref<2x4x16xf32, #tpu.memory_space<vmem>>, vector<1x4x16xf32>
    %23 = vector.shape_cast %22 : vector<1x4x16xf32> to vector<4x16xf32>
    %cst_12 = arith.constant 0.000000e+00 : f32
    %24 = vector.broadcast %cst_12 : f32 to vector<4x112xf32>
    %25 = tpu.concatenate %23, %24 in 1 : vector<4x16xf32>, vector<4x112xf32> -> vector<4x128xf32>
    %cst_13 = arith.constant dense<0.000000e+00> : vector<32x128xf32>
    %26 = tpu.matmul %0, %25, %cst_13 {dimension_numbers = #tpu.dot_dimension_numbers<[1], [0], [0], [1], [0, 0, 1, 1], [], []>} : vector<32x4xf32>, vector<4x128xf32>, vector<32x128xf32> -> vector<32x128xf32>
    %27 = vector.extract_strided_slice %26 {offsets = [0, 0], sizes = [8, 128], strides = [1, 1]} : vector<32x128xf32> to vector<8x128xf32>
    %28 = vector.extract_strided_slice %26 {offsets = [8, 0], sizes = [8, 128], strides = [1, 1]} : vector<32x128xf32> to vector<8x128xf32>
    %c1_i32_14 = arith.constant 1 : i32
    %29 = tpu.dynamic_rotate %28 by %c1_i32_14 dim 1 : vector<8x128xf32>, i32 -> vector<8x128xf32>
    %30 = arith.addf %27, %29 : vector<8x128xf32>
    %31 = vector.extract_strided_slice %26 {offsets = [16, 0], sizes = [8, 128], strides = [1, 1]} : vector<32x128xf32> to vector<8x128xf32>
    %c2_i32_15 = arith.constant 2 : i32
    %32 = tpu.dynamic_rotate %31 by %c2_i32_15 dim 1 : vector<8x128xf32>, i32 -> vector<8x128xf32>
    %33 = arith.addf %30, %32 : vector<8x128xf32>
    %34 = vector.extract_strided_slice %26 {offsets = [24, 0], sizes = [8, 128], strides = [1, 1]} : vector<32x128xf32> to vector<8x128xf32>
    %c3_i32_16 = arith.constant 3 : i32
    %35 = tpu.dynamic_rotate %34 by %c3_i32_16 dim 1 : vector<8x128xf32>, i32 -> vector<8x128xf32>
    %36 = arith.addf %33, %35 : vector<8x128xf32>
    %37 = vector.broadcast %1 : vector<8x1xf32> to vector<8x128xf32>
    %38 = arith.addf %36, %37 : vector<8x128xf32>
    %c1_17 = arith.constant 1 : index
    %c0_18 = arith.constant 0 : index
    %c0_19 = arith.constant 0 : index
    %39 = vector.load %arg4[%c1_17, %c0_18, %c0_19] : memref<2x8x128xf32, #tpu.memory_space<vmem>>, vector<1x8x128xf32>
    %40 = vector.shape_cast %39 : vector<1x8x128xf32> to vector<8x128xf32>
    %41 = vector.shape_cast %38 : vector<8x128xf32> to vector<1x8x128xf32>
    tpu.vector_store %arg4[%c1_17, %c0_18, %c0_19], %41 {strides = array<i32>} : memref<2x8x128xf32, #tpu.memory_space<vmem>>, vector<1x8x128xf32>,
    return
  }
  func.func @transform_0(%arg0: i32) -> (i32, i32, i32) {
    %c0_i32 = arith.constant 0 : i32
    %c0_i32_0 = arith.constant 0 : i32
    %c0_i32_1 = arith.constant 0 : i32
    return %arg0, %c0_i32, %c0_i32_0 : i32, i32, i32
  }
  func.func @transform_1(%arg0: i32) -> (i32, i32) {
    %c0_i32 = arith.constant 0 : i32
    %c0_i32_0 = arith.constant 0 : i32
    %c0_i32_1 = arith.constant 0 : i32
    return %c0_i32, %c0_i32_0 : i32, i32
  }
  func.func @transform_2(%arg0: i32) -> (i32, i32) {
    %c0_i32 = arith.constant 0 : i32
    %c0_i32_0 = arith.constant 0 : i32
    %c0_i32_1 = arith.constant 0 : i32
    return %c0_i32, %c0_i32_0 : i32, i32
  }
  func.func @transform_3(%arg0: i32) -> (i32, i32, i32) {
    %c0_i32 = arith.constant 0 : i32
    %c0_i32_0 = arith.constant 0 : i32
    %c0_i32_1 = arith.constant 0 : i32
    return %arg0, %c0_i32, %c0_i32_0 : i32, i32, i32
  }
}

</mosaic_0001>

<llo_original>
// kernel: tpu_custom_call.1
$region0: #{tpu_custom_call.1}
  #allocation0 [shape = 'u32[]', space=smem, size = 0x4, offset = 0x4, fixed_abs, tag = 'smem constant byte address 0x4 - core index']
  #allocation1 [shape = 'u32[144,128]{1,0:T(1,128)}', space=vmem, size = 0x12000, scoped, tag = 'internal scratch']
  %s0 = inlined_call_operand.vmem [shape: f32[2,4,16], index: 0, kind: input, shape index: {}]
  %s1 = inlined_call_operand.vmem [shape: f32[32,4], index: 1, kind: input, shape index: {}]
  %s2 = inlined_call_operand.vmem [shape: f32[8,1], index: 2, kind: input, shape index: {}]
  %s3 = inlined_call_operand.hbm [shape: f32[2,8,128], index: 3, kind: output, shape index: {}]
  %s4 = sld [smem:[#allocation0]]
  $region22: #{tpu_custom_call.1} parent=0
    _
  %s6 = ssub.s32 1, %s4
  %s7 = scalar_select 0, %s6, %s4
  $region1: #{tpu_custom_call.1} parent=0
    #allocation2 [shape = 'u8[8192]{0}', space=vmem, size = 0x2000, scoped, tag = 'output window, operand 0, single buffered']
    #allocation3 [shape = 's32[1]{0}', space=sflag, size = 0x4, scoped, tag = 'scoped memory for tpu_custom_call.1']
    %8 = vsyncpa [#allocation3], 0
    // Predicated region
    $region2: #{tpu_custom_call.1} parent=1 // pred_check
      _
    $region3: #{tpu_custom_call.1} parent=1 // pred_check_branch
      %10 = sbr.rel (0) target = $region5
    $region4: #{tpu_custom_call.1} parent=1 // pred_region
      _
    $region5: #{tpu_custom_call.1} parent=1 // pred_fallthru
      _
    // Predicated region
    $region6: #{tpu_custom_call.1} parent=1 // pred_check
      _
    $region7: #{tpu_custom_call.1} parent=1 // pred_check_branch
      %12 = sbr.rel (0) target = $region9
    $region8: #{tpu_custom_call.1} parent=1 // pred_region
      _
    $region9: #{tpu_custom_call.1} parent=1 // pred_fallthru
      _
    // Predicated region
    $region10: #{tpu_custom_call.1} parent=1 // pred_check
      _
    $region11: #{tpu_custom_call.1} parent=1 // pred_check_branch
      %14 = sbr.rel (0) target = $region13
    $region12: #{tpu_custom_call.1} parent=1 // pred_region
      _
    $region13: #{tpu_custom_call.1} parent=1 // pred_fallthru
      _
    %v15 = vld [vmem:[%s1] sm:$0xff]
    %v16 = vld [vmem:[%s1 + $0x8] sm:$0xff]
    %v17 = vld [vmem:[%s1 + $0x10] sm:$0xff]
    %v18 = vld [vmem:[%s1 + $0x18] sm:$0xff]
    %v19 = vld [vmem:[%s2] sm:$0xff]
    %v20 = vld [vmem:[%s0] sm:$0xf]
    %vm21 = vcmask 130048
    %v22 = vsel %vm21, %v20, 0.0
    %vm23 = vcmask 31744
    %v25 = vsel %vm23, %v15, 0
    %v28 = vsel %vm23, %v16, 0
    %v31 = vsel %vm23, %v17, 0
    %v34 = vsel %vm23, %v18, 0
    %vm36 = vcmask 1043456
    %v38 = vsel %vm36, %v22, 0
    %40 = vmatprep.subr.mxu0 0.0
    %41 = vmatpush1.msra.mxu0 0.0
    %42 = vmatprep.subr.mxu0 0.0
    %43 = vmatpush1.msra.mxu0 0.0
    %44 = vmatprep.subr.mxu0 0.0
    %45 = vmatpush1.msra.mxu0 0.0
    %46 = vmatprep.subr.mxu0 0.0
    %47 = vmatpush1.msra.mxu0 0.0
    %48 = vmatprep.subr.mxu0 0.0
    %49 = vmatpush1.msra.mxu0 0.0
    %50 = vmatprep.subr.mxu0 0.0
    %51 = vmatpush1.msra.mxu0 0.0
    %52 = vmatprep.subr.mxu0 0.0
    %53 = vmatpush1.msra.mxu0 0.0
    %54 = vmatprep.subr.mxu0 0.0
    %55 = vmatpush1.msra.mxu0 0.0
    %56 = vmatprep.subr.mxu0 0.0
    %57 = vmatpush1.msra.mxu0 0.0
    %58 = vmatprep.subr.mxu0 0.0
    %59 = vmatpush1.msra.mxu0 0.0
    %60 = vmatprep.subr.mxu0 0.0
    %61 = vmatpush1.msra.mxu0 0.0
    %62 = vmatprep.subr.mxu0 0.0
    %63 = vmatpush1.msra.mxu0 0.0
    %64 = vmatprep.subr.mxu0 0.0
    %65 = vmatpush1.msra.mxu0 0.0
    %66 = vmatprep.subr.mxu0 0.0
    %67 = vmatpush1.msra.mxu0 0.0
    %68 = vmatprep.subr.mxu0 0.0
    %69 = vmatpush1.msra.mxu0 0.0
    %70 = vmatprep.subr.mxu0 0.0
    %71 = vmatpush1.msra.mxu0 %v38
    %72 = vmatprep.subr.mxu0 0.0
    %73 = vmatpush2.msra.mxu0 0.0
    %74 = vmatprep.subr.mxu0 0.0
    %75 = vmatpush2.msra.mxu0 0.0
    %76 = vmatprep.subr.mxu0 0.0
    %77 = vmatpush2.msra.mxu0 0.0
    %78 = vmatprep.subr.mxu0 0.0
    %79 = vmatpush2.msra.mxu0 0.0
    %80 = vmatprep.subr.mxu0 0.0
    %81 = vmatpush2.msra.mxu0 0.0
    %82 = vmatprep.subr.mxu0 0.0
    %83 = vmatpush2.msra.mxu0 0.0
    %84 = vmatprep.subr.mxu0 0.0
    %85 = vmatpush2.msra.mxu0 0.0
    %86 = vmatprep.subr.mxu0 0.0
    %87 = vmatpush2.msra.mxu0 0.0
    %88 = vmatprep.subr.mxu0 0.0
    %89 = vmatpush2.msra.mxu0 0.0
    %90 = vmatprep.subr.mxu0 0.0
    %91 = vmatpush2.msra.mxu0 0.0
    %92 = vmatprep.subr.mxu0 0.0
    %93 = vmatpush2.msra.mxu0 0.0
    %94 = vmatprep.subr.mxu0 0.0
    %95 = vmatpush2.msra.mxu0 0.0
    %96 = vmatprep.subr.mxu0 0.0
    %97 = vmatpush2.msra.mxu0 0.0
    %98 = vmatprep.subr.mxu0 0.0
    %99 = vmatpush2.msra.mxu0 0.0
    %100 = vmatprep.subr.mxu0 0.0
    %101 = vmatpush2.msra.mxu0 0.0
    %102 = vmatprep.subr.mxu0 0.0
    %103 = vmatpush2.msra.mxu0 0.0
    %104 = vmatprep.mubr.f32.mxu0 0.0
    %105 = vmatmul.mubr.f32.gmra.mxu0 %v25
    %v106 = vpop.f32.mrf.mxu0
    %v107 = vadd.f32 0.0, %v106
    %v108 = vpop.f32.mrf.mxu0
    %109 = vmatprep.mubr.f32.mxu0 0.0
    %110 = vmatmul.mubr.f32.gmra.mxu0 %v28
    %v111 = vpop.f32.mrf.mxu0
    %v112 = vadd.f32 0.0, %v111
    %v113 = vpop.f32.mrf.mxu0
    %114 = vmatprep.mubr.f32.mxu0 0.0
    %115 = vmatmul.mubr.f32.gmra.mxu0 %v31
    %v116 = vpop.f32.mrf.mxu0
    %v117 = vadd.f32 0.0, %v116
    %v118 = vpop.f32.mrf.mxu0
    %119 = vmatprep.mubr.f32.mxu0 0.0
    %120 = vmatmul.mubr.f32.gmra.mxu0 %v34
    %v121 = vpop.f32.mrf.mxu0
    %v122 = vadd.f32 0.0, %v121
    %v123 = vpop.f32.mrf.mxu0
    %124 = vdwg.mxu0
    %125 = vrot.lane.b32.xlu0 %v112, 1
    %v126 = vpop.permute.xlu0 %125
    %v127 = vadd.f32 %v107, %v126
    %128 = vrot.lane.b32.xlu0 %v117, 2
    %v129 = vpop.permute.xlu0 %128
    %v130 = vadd.f32 %v127, %v129
    %131 = vrot.lane.b32.xlu0 %v122, 3
    %v132 = vpop.permute.xlu0 %131
    %v133 = vadd.f32 %v130, %v132
    %135 = vset.pattern.permute.xlu0 0
    %136 = vperm.xlu0 %135, %v19
    %v137 = vpop.permute.xlu0 %136
    %v139 = vadd.f32 %v133, %v137
    %140 = vst [vmem:[#allocation2] sm:$0xff] %v139
    %s141 = scalar_lea.vmem %s0, 4
    %v142 = vld [vmem:[%s141] sm:$0xf]
    %v143 = vsel %vm21, %v142, 0.0
    %v145 = vsel %vm36, %v143, 0
    %147 = vmatprep.subr.mxu0 0.0
    %148 = vmatpush1.msra.mxu0 0.0
    %149 = vmatprep.subr.mxu0 0.0
    %150 = vmatpush1.msra.mxu0 0.0
    %151 = vmatprep.subr.mxu0 0.0
    %152 = vmatpush1.msra.mxu0 0.0
    %153 = vmatprep.subr.mxu0 0.0
    %154 = vmatpush1.msra.mxu0 0.0
    %155 = vmatprep.subr.mxu0 0.0
    %156 = vmatpush1.msra.mxu0 0.0
    %157 = vmatprep.subr.mxu0 0.0
    %158 = vmatpush1.msra.mxu0 0.0
    %159 = vmatprep.subr.mxu0 0.0
    %160 = vmatpush1.msra.mxu0 0.0
    %161 = vmatprep.subr.mxu0 0.0
    %162 = vmatpush1.msra.mxu0 0.0
    %163 = vmatprep.subr.mxu0 0.0
    %164 = vmatpush1.msra.mxu0 0.0
    %165 = vmatprep.subr.mxu0 0.0
    %166 = vmatpush1.msra.mxu0 0.0
    %167 = vmatprep.subr.mxu0 0.0
    %168 = vmatpush1.msra.mxu0 0.0
    %169 = vmatprep.subr.mxu0 0.0
    %170 = vmatpush1.msra.mxu0 0.0
    %171 = vmatprep.subr.mxu0 0.0
    %172 = vmatpush1.msra.mxu0 0.0
    %173 = vmatprep.subr.mxu0 0.0
    %174 = vmatpush1.msra.mxu0 0.0
    %175 = vmatprep.subr.mxu0 0.0
    %176 = vmatpush1.msra.mxu0 0.0
    %177 = vmatprep.subr.mxu0 0.0
    %178 = vmatpush1.msra.mxu0 %v145
    %179 = vmatprep.subr.mxu0 0.0
    %180 = vmatpush2.msra.mxu0 0.0
    %181 = vmatprep.subr.mxu0 0.0
    %182 = vmatpush2.msra.mxu0 0.0
    %183 = vmatprep.subr.mxu0 0.0
    %184 = vmatpush2.msra.mxu0 0.0
    %185 = vmatprep.subr.mxu0 0.0
    %186 = vmatpush2.msra.mxu0 0.0
    %187 = vmatprep.subr.mxu0 0.0
    %188 = vmatpush2.msra.mxu0 0.0
    %189 = vmatprep.subr.mxu0 0.0
    %190 = vmatpush2.msra.mxu0 0.0
    %191 = vmatprep.subr.mxu0 0.0
    %192 = vmatpush2.msra.mxu0 0.0
    %193 = vmatprep.subr.mxu0 0.0
    %194 = vmatpush2.msra.mxu0 0.0
    %195 = vmatprep.subr.mxu0 0.0
    %196 = vmatpush2.msra.mxu0 0.0
    %197 = vmatprep.subr.mxu0 0.0
    %198 = vmatpush2.msra.mxu0 0.0
    %199 = vmatprep.subr.mxu0 0.0
    %200 = vmatpush2.msra.mxu0 0.0
    %201 = vmatprep.subr.mxu0 0.0
    %202 = vmatpush2.msra.mxu0 0.0
    %203 = vmatprep.subr.mxu0 0.0
    %204 = vmatpush2.msra.mxu0 0.0
    %205 = vmatprep.subr.mxu0 0.0
    %206 = vmatpush2.msra.mxu0 0.0
    %207 = vmatprep.subr.mxu0 0.0
    %208 = vmatpush2.msra.mxu0 0.0
    %209 = vmatprep.subr.mxu0 0.0
    %210 = vmatpush2.msra.mxu0 0.0
    %211 = vmatprep.mubr.f32.mxu0 0.0
    %212 = vmatmul.mubr.f32.gmra.mxu0 %v25
    %v213 = vpop.f32.mrf.mxu0
    %v214 = vadd.f32 0.0, %v213
    %v215 = vpop.f32.mrf.mxu0
    %216 = vmatprep.mubr.f32.mxu0 0.0
    %217 = vmatmul.mubr.f32.gmra.mxu0 %v28
    %v218 = vpop.f32.mrf.mxu0
    %v219 = vadd.f32 0.0, %v218
    %v220 = vpop.f32.mrf.mxu0
    %221 = vmatprep.mubr.f32.mxu0 0.0
    %222 = vmatmul.mubr.f32.gmra.mxu0 %v31
    %v223 = vpop.f32.mrf.mxu0
    %v224 = vadd.f32 0.0, %v223
    %v225 = vpop.f32.mrf.mxu0
    %226 = vmatprep.mubr.f32.mxu0 0.0
    %227 = vmatmul.mubr.f32.gmra.mxu0 %v34
    %v228 = vpop.f32.mrf.mxu0
    %v229 = vadd.f32 0.0, %v228
    %v230 = vpop.f32.mrf.mxu0
    %231 = vdwg.mxu0
    %232 = vrot.lane.b32.xlu0 %v219, 1
    %v233 = vpop.permute.xlu0 %232
    %v234 = vadd.f32 %v214, %v233
    %235 = vrot.lane.b32.xlu0 %v224, 2
    %v236 = vpop.permute.xlu0 %235
    %v237 = vadd.f32 %v234, %v236
    %238 = vrot.lane.b32.xlu0 %v229, 3
    %v239 = vpop.permute.xlu0 %238
    %v240 = vadd.f32 %v237, %v239
    %v241 = vadd.f32 %v240, %v137
    %s242 = scalar_lea.vmem [#allocation2], 8
    %243 = vst [vmem:[%s242] sm:$0xff] %v241
    // Predicated region
    $region14: #{tpu_custom_call.1} parent=1 // pred_check
      _
    $region15: #{tpu_custom_call.1} parent=1 // pred_check_branch
      %245 = sbr.rel (0) target = $region17
    $region16: #{tpu_custom_call.1} parent=1 // pred_region
      %s247 = ssub.s32 256, 256
      %248 = vsyncadd [#allocation3], %s247
      %s249 = sshll.u32 [#allocation2], 4
      %s250 = int_to_ptr.vmem [resolvable:$true] %s249
      %255 = dma.vmem_to_hbm [thread:$0]  %s250, 256, %s3, [#allocation3], 128, 128, 8
    $region17: #{tpu_custom_call.1} parent=1 // pred_fallthru
      _
    // Predicated region
    $region18: #{tpu_custom_call.1} parent=1 // pred_check
      _
    $region19: #{tpu_custom_call.1} parent=1 // pred_check_branch
      %257 = sbr.rel (0) target = $region21
    $region20: #{tpu_custom_call.1} parent=1 // pred_region
      %258 = dma.done [#allocation3], 256
    $region21: #{tpu_custom_call.1} parent=1 // pred_fallthru
      _
    %259 = vsyncpa [#allocation3], 1

</llo_original>
